<compile_context>
chip_gen: v5e
topology: v5e:2x2
jax: 0.10.0
libtpu: 0.0.40
codegen_flags: <defaults>
</compile_context>

<pallas_src>
import jax
import jax.numpy as jnp
from jax import lax
from jax.experimental import pallas as pl
from jax.experimental.pallas import tpu as pltpu


def _round_up(x, m):
    return (x + m - 1) // m * m


def _default_tiles():
    """Generation-aware default tiles (fall back to v7x-safe sizes)."""
    vmem_bytes = 64 << 20
    try:
        info = pltpu.get_tpu_info()
        for attr in ("vmem_capacity_bytes", "vmem_size_bytes", "vmem_bytes"):
            v = getattr(info, attr, None)
            if v:
                vmem_bytes = int(v)
                break
    except Exception:
        pass
    if vmem_bytes >= (100 << 20):      # v5e / v6e: 128 MiB VMEM
        return 1024, 1024, 1024
    return 512, 1024, 1024             # v7x: 64 MiB VMEM per TensorCore


def _delta_kernel_f32out(x_ref, bt_ref, xvs_ref, ut_ref, y_ref):
    # grid = (i: M tiles [parallel], j: O tiles [parallel], k: I reduction [arbitrary])
    # Output block (i, j) is resident across k -> accumulate directly in f32.
    k = pl.program_id(2)

    @pl.when(k == 0)
    def _():
        # Low-rank contribution once per (i, j): (tm, Rp) @ (Rp, tn)
        y_ref[...] = jnp.dot(xvs_ref[...], ut_ref[...],
                             preferred_element_type=jnp.float32)

    # Main path: (tm, tk) @ (tk, tn), canonical MXU form (no transpose).
    y_ref[...] += jnp.dot(x_ref[...], bt_ref[...],
                          preferred_element_type=jnp.float32)


def _delta_kernel_acc(x_ref, bt_ref, xvs_ref, ut_ref, y_ref, acc_ref):
    # Variant with an f32 scratch accumulator for non-f32 output dtypes.
    k = pl.program_id(2)

    @pl.when(k == 0)
    def _():
        acc_ref[...] = jnp.dot(xvs_ref[...], ut_ref[...],
                               preferred_element_type=jnp.float32)

    acc_ref[...] += jnp.dot(x_ref[...], bt_ref[...],
                            preferred_element_type=jnp.float32)

    @pl.when(k == pl.num_programs(2) - 1)
    def _():
        y_ref[...] = acc_ref[...].astype(y_ref.dtype)


def delta_forward(x, base, U, S, V, *, tm=None, tn=None, tk=None,
                  compute_dtype=jnp.bfloat16):
    """x: (..., I); base: (O, I); U: (O, R); S: (R,); V: (I, R) -> (..., O)."""
    orig_shape = x.shape
    I = orig_shape[-1]
    O = base.shape[0]
    R = S.shape[0]
    out_dtype = x.dtype

    x2d = x.reshape(-1, I)
    M = x2d.shape[0]

    dtm, dtn, dtk = _default_tiles()
    tm = dtm if tm is None else tm
    tn = dtn if tn is None else tn
    tk = dtk if tk is None else tk

    # Clamp tiles to the (rounded) problem size; keep TPU-friendly multiples.
    tm = min(tm, _round_up(M, 16))        # full bf16 sublane packing
    tn = min(tn, _round_up(O, 128))       # lane-dense output tiles
    tk = min(tk, _round_up(I, 128))

    Mp = _round_up(M, tm)
    Op = _round_up(O, tn)
    Ip = _round_up(I, tk)
    Rp = _round_up(R, 128)                # lane-dense low-rank operands

    cd = compute_dtype
    x_c = x2d.astype(cd)

    # Precompute the rank-R projection once (depends only on rows of x);
    # S is applied in f32 on the tiny (M, R) intermediate.
    xv = jnp.dot(x_c, V.astype(cd), preferred_element_type=jnp.float32)
    xvs = (xv * S.astype(jnp.float32)[None, :]).astype(cd)          # (M, R)

    xp = jnp.pad(x_c, ((0, Mp - M), (0, Ip - I)))                   # (Mp, Ip)
    bt = jnp.pad(base.astype(cd).T, ((0, Ip - I), (0, Op - O)))     # (Ip, Op)
    ut = jnp.pad(U.astype(cd).T, ((0, Rp - R), (0, Op - O)))        # (Rp, Op)
    xvsp = jnp.pad(xvs, ((0, Mp - M), (0, Rp - R)))                 # (Mp, Rp)

    grid = (Mp // tm, Op // tn, Ip // tk)

    accumulate_in_out = jnp.dtype(out_dtype) == jnp.dtype(jnp.float32)
    if accumulate_in_out:
        kernel = _delta_kernel_f32out
        scratch_shapes = []
    else:
        kernel = _delta_kernel_acc
        scratch_shapes = [pltpu.VMEM((tm, tn), jnp.float32)]

    # VMEM budget: double-buffered inputs/outputs + optional f32 scratch.
    bpe = jnp.dtype(cd).itemsize
    out_b = jnp.dtype(out_dtype).itemsize
    vmem_need = (2 * (tm * tk + tk * tn + tm * Rp + Rp * tn) * bpe
                 + 2 * tm * tn * out_b)
    if not accumulate_in_out:
        vmem_need += tm * tn * 4
    vmem_limit = int(min(max(vmem_need + (8 << 20), 32 << 20), 48 << 20))

    cost = pl.CostEstimate(
        flops=2 * Mp * Op * Ip + 2 * Mp * Op * Rp,
        transcendentals=0,
        bytes_accessed=(xp.size + bt.size + ut.size + xvsp.size) * bpe
                       + Mp * Op * out_b,
    )

    out = pl.pallas_call(
        kernel,
        out_shape=jax.ShapeDtypeStruct((Mp, Op), out_dtype),
        grid_spec=pltpu.PrefetchScalarGridSpec(
            num_scalar_prefetch=0,
            grid=grid,
            in_specs=[
                pl.BlockSpec((tm, tk), lambda i, j, k: (i, k)),   # x
                pl.BlockSpec((tk, tn), lambda i, j, k: (k, j)),   # base.T
                pl.BlockSpec((tm, Rp), lambda i, j, k: (i, 0)),   # (x@V)*S
                pl.BlockSpec((Rp, tn), lambda i, j, k: (0, j)),   # U.T
            ],
            out_specs=pl.BlockSpec((tm, tn), lambda i, j, k: (i, j)),
            scratch_shapes=scratch_shapes,
        ),
        compiler_params=pltpu.CompilerParams(
            dimension_semantics=("parallel", "parallel", "arbitrary"),
            vmem_limit_bytes=vmem_limit),
        cost_estimate=cost,
    )(xp, bt, xvsp, ut)

    return out[:M, :O].reshape(*orig_shape[:-1], O)


def delta_reference(x, base, U, S, V):
    w = base + (U * S[None, :]) @ V.T
    return x @ w.T


# TODO(synk): the gptq calibration branch (gptq.add_batch) and the buffer
# mutation methods (pre_quant/post_quant) are host-side bookkeeping with no
# Pallas equivalent; only the dense forward y = x @ (base + U diag(S) V^T)^T
# is implemented here.

if __name__ == "__main__":
    key = jax.random.PRNGKey(0)
    kx, kb, ku, ks, kv = jax.random.split(key, 5)

    def q(a):
        return a.astype(jnp.bfloat16).astype(jnp.float32)

    # ---- Test 1: shapes consistent with the module's forward -------------
    # x: (batch=2, seq=8, in_features=256); base: (256, 256); rank R=8.
    B, Sq, I, O, R = 2, 8, 256, 256, 8
    x = jax.random.normal(kx, (B, Sq, I), dtype=jnp.float32)
    base = jax.random.normal(kb, (O, I), dtype=jnp.float32) * 0.1
    U = jax.random.normal(ku, (O, R), dtype=jnp.float32) * 0.1
    S = jax.random.uniform(ks, (R,), dtype=jnp.float32)
    V = jax.random.normal(kv, (I, R), dtype=jnp.float32) * 0.1

    y = delta_forward(x, base, U, S, V)
    y = jax.block_until_ready(y)
    assert y.shape == (B, Sq, O)

    # Kernel uses bf16 matmul operands with f32 accumulation; compare against
    # an f32 reference fed the same bf16-quantized inputs (S stays f32).
    y_ref = delta_reference(q(x), q(base), q(U), S, q(V))
    assert jnp.allclose(y, y_ref, atol=1e-2, rtol=1e-2), "mismatch vs reference"
    y_ref_f32 = delta_reference(x, base, U, S, V)
    assert jnp.allclose(y, y_ref_f32, atol=5e-2, rtol=5e-2), "mismatch vs f32 ref"

    # ---- Test 2: force a multi-tile grid to exercise the k-reduction ------
    k2 = jax.random.split(jax.random.PRNGKey(1), 5)
    B2, S2, I2, O2, R2 = 2, 24, 512, 384, 8
    x2 = jax.random.normal(k2[0], (B2, S2, I2), dtype=jnp.float32)
    base2 = jax.random.normal(k2[1], (O2, I2), dtype=jnp.float32) * 0.1
    U2 = jax.random.normal(k2[2], (O2, R2), dtype=jnp.float32) * 0.1
    S2v = jax.random.uniform(k2[3], (R2,), dtype=jnp.float32)
    V2 = jax.random.normal(k2[4], (I2, R2), dtype=jnp.float32) * 0.1

    y2 = delta_forward(x2, base2, U2, S2v, V2, tm=16, tn=128, tk=128)
    y2 = jax.block_until_ready(y2)
    y2_ref = delta_reference(q(x2), q(base2), q(U2), S2v, q(V2))
    assert y2.shape == (B2, S2, O2)
    assert jnp.allclose(y2, y2_ref, atol=2e-2, rtol=2e-2), "multi-tile mismatch"

    # ---- Test 3: bf16 output path (scratch-accumulator kernel variant) ----
    y3 = delta_forward(x.astype(jnp.bfloat16), base, U, S, V)
    y3 = jax.block_until_ready(y3)
    assert y3.dtype == jnp.bfloat16
    assert jnp.allclose(y3.astype(jnp.float32), y_ref, atol=5e-2, rtol=5e-2), \
        "bf16-output mismatch"

    print("KERNEL_OK")
</pallas_src>

<mosaic_0001>
module attributes {stable_mosaic.version = 11 : i64} {
  func.func @_delta_kernel_f32out(%arg0: i32, %arg1: i32, %arg2: i32, %arg3: memref<16x256xbf16, #tpu.memory_space<vmem>>, %arg4: memref<256x256xbf16, #tpu.memory_space<vmem>>, %arg5: memref<16x128xbf16, #tpu.memory_space<vmem>>, %arg6: memref<128x256xbf16, #tpu.memory_space<vmem>>, %arg7: memref<16x256xf32, #tpu.memory_space<vmem>>) attributes {dimension_semantics = [#tpu.dimension_semantics<parallel>, #tpu.dimension_semantics<parallel>, #tpu.dimension_semantics<arbitrary>], iteration_bounds = array<i64: 1, 1, 1>, scalar_prefetch = 0 : i64, scratch_operands = 0 : i64, tpu.core_type = #tpu.core_type<tc>, window_params = [{transform_indices = @transform_0, window_bounds = array<i64: 16, 256>}, {transform_indices = @transform_1, window_bounds = array<i64: 256, 256>}, {transform_indices = @transform_2, window_bounds = array<i64: 16, 128>}, {transform_indices = @transform_3, window_bounds = array<i64: 128, 256>}, {transform_indices = @transform_4, window_bounds = array<i64: 16, 256>}]} {
    %c0_i32 = arith.constant 0 : i32
    %0 = arith.cmpi eq, %arg2, %c0_i32 : i32
    %1 = arith.extui %0 : i1 to i32
    %c0_i32_0 = arith.constant 0 : i32
    %2 = arith.cmpi ne, %1, %c0_i32_0 : i32
    scf.if %2 {
      %c0_8 = arith.constant 0 : index
      %c0_9 = arith.constant 0 : index
      %9 = vector.load %arg5[%c0_8, %c0_9] : memref<16x128xbf16, #tpu.memory_space<vmem>>, vector<16x128xbf16>
      %c0_10 = arith.constant 0 : index
      %c0_11 = arith.constant 0 : index
      %10 = vector.load %arg6[%c0_10, %c0_11] : memref<128x256xbf16, #tpu.memory_space<vmem>>, vector<128x256xbf16>
      %cst_12 = arith.constant dense<0.000000e+00> : vector<16x256xf32>
      %11 = tpu.matmul %9, %10, %cst_12 {dimension_numbers = #tpu.dot_dimension_numbers<[1], [0], [0], [1], [0, 0, 1, 1], [], []>} : vector<16x128xbf16>, vector<128x256xbf16>, vector<16x256xf32> -> vector<16x256xf32>
      %c0_13 = arith.constant 0 : index
      %c0_14 = arith.constant 0 : index
      %12 = vector.load %arg7[%c0_13, %c0_14] : memref<16x256xf32, #tpu.memory_space<vmem>>, vector<16x256xf32>
      tpu.vector_store %arg7[%c0_13, %c0_14], %11 {strides = array<i32>} : memref<16x256xf32, #tpu.memory_space<vmem>>, vector<16x256xf32>,
    } else {
    }
    %c0 = arith.constant 0 : index
    %c0_1 = arith.constant 0 : index
    %3 = vector.load %arg7[%c0, %c0_1] : memref<16x256xf32, #tpu.memory_space<vmem>>, vector<16x256xf32>
    %c0_2 = arith.constant 0 : index
    %c0_3 = arith.constant 0 : index
    %4 = vector.load %arg3[%c0_2, %c0_3] : memref<16x256xbf16, #tpu.memory_space<vmem>>, vector<16x256xbf16>
    %c0_4 = arith.constant 0 : index
    %c0_5 = arith.constant 0 : index
    %5 = vector.load %arg4[%c0_4, %c0_5] : memref<256x256xbf16, #tpu.memory_space<vmem>>, vector<256x256xbf16>
    %cst = arith.constant dense<0.000000e+00> : vector<16x256xf32>
    %6 = tpu.matmul %4, %5, %cst {dimension_numbers = #tpu.dot_dimension_numbers<[1], [0], [0], [1], [0, 0, 1, 1], [], []>} : vector<16x256xbf16>, vector<256x256xbf16>, vector<16x256xf32> -> vector<16x256xf32>
    %7 = arith.addf %3, %6 : vector<16x256xf32>
    %c0_6 = arith.constant 0 : index
    %c0_7 = arith.constant 0 : index
    %8 = vector.load %arg7[%c0_6, %c0_7] : memref<16x256xf32, #tpu.memory_space<vmem>>, vector<16x256xf32>
    tpu.vector_store %arg7[%c0_6, %c0_7], %7 {strides = array<i32>} : memref<16x256xf32, #tpu.memory_space<vmem>>, vector<16x256xf32>,
    return
  }
  func.func @transform_0(%arg0: i32, %arg1: i32, %arg2: i32) -> (i32, i32) {
    %c0_i32 = arith.constant 0 : i32
    return %arg0, %arg2 : i32, i32
  }
  func.func @transform_1(%arg0: i32, %arg1: i32, %arg2: i32) -> (i32, i32) {
    %c0_i32 = arith.constant 0 : i32
    return %arg2, %arg1 : i32, i32
  }
  func.func @transform_2(%arg0: i32, %arg1: i32, %arg2: i32) -> (i32, i32) {
    %c0_i32 = arith.constant 0 : i32
    %c0_i32_0 = arith.constant 0 : i32
    return %arg0, %c0_i32 : i32, i32
  }
  func.func @transform_3(%arg0: i32, %arg1: i32, %arg2: i32) -> (i32, i32) {
    %c0_i32 = arith.constant 0 : i32
    %c0_i32_0 = arith.constant 0 : i32
    return %c0_i32, %arg1 : i32, i32
  }
  func.func @transform_4(%arg0: i32, %arg1: i32, %arg2: i32) -> (i32, i32) {
    %c0_i32 = arith.constant 0 : i32
    return %arg0, %arg1 : i32, i32
  }
}

</mosaic_0001>

<llo_original>
// kernel: tpu_custom_call.1
$region0: #{tpu_custom_call.1}
  #allocation0 [shape = 'u32[]', space=smem, size = 0x4, offset = 0x4, fixed_abs, tag = 'smem constant byte address 0x4 - core index']
  #allocation1 [shape = 'u32[72,128]{1,0:T(1,128)}', space=vmem, size = 0x9000, scoped, tag = 'internal scratch']
  %s0 = inlined_call_operand.hbm [shape: bf16[16,256], index: 0, kind: input, shape index: {}]
  %s1 = inlined_call_operand.hbm [shape: bf16[256,256], index: 1, kind: input, shape index: {}]
  %s2 = inlined_call_operand.hbm [shape: bf16[16,128], index: 2, kind: input, shape index: {}]
  %s3 = inlined_call_operand.hbm [shape: bf16[128,256], index: 3, kind: input, shape index: {}]
  %s4 = inlined_call_operand.hbm [shape: f32[16,256], index: 4, kind: output, shape index: {}]
  %s5 = sld [smem:[#allocation0]]
  $region46: #{tpu_custom_call.1} parent=0
    _
  %s7 = ssub.s32 1, %s5
  %s8 = scalar_select 0, %s7, %s5
  $region1: #{tpu_custom_call.1} parent=0
    #allocation2 [shape = 'u8[8192]{0}', space=vmem, size = 0x2000, scoped, tag = 'input window, operand 0, single buffered']
    #allocation3 [shape = 's32[1]{0}', space=sflag, size = 0x4, scoped, tag = 'scoped memory for tpu_custom_call.1']
    #allocation4 [shape = 's32[1]{0}', space=sflag, size = 0x4, scoped, tag = 'scoped memory for tpu_custom_call.1']
    #allocation5 [shape = 'u8[131072]{0}', space=vmem, size = 0x20000, scoped, tag = 'input window, operand 1, single buffered']
    #allocation6 [shape = 's32[1]{0}', space=sflag, size = 0x4, scoped, tag = 'scoped memory for tpu_custom_call.1']
    #allocation7 [shape = 'u8[4096]{0}', space=vmem, size = 0x1000, scoped, tag = 'input window, operand 2, single buffered']
    #allocation8 [shape = 'u8[65536]{0}', space=vmem, size = 0x10000, scoped, tag = 'input window, operand 3, single buffered']
    #allocation9 [shape = 's32[1]{0}', space=sflag, size = 0x4, scoped, tag = 'scoped memory for tpu_custom_call.1']
    #allocation10 [shape = 'u8[16384]{0}', space=vmem, size = 0x4000, scoped, tag = 'output window, operand 0, single buffered']
    %9 = vsyncpa [#allocation3], 0
    %10 = vsyncpa [#allocation6], 0
    %11 = vsyncpa [#allocation9], 0
    %12 = vsyncpa [#allocation4], 0
    // Predicated region
    $region2: #{tpu_custom_call.1} parent=1 // pred_check
      _
    $region3: #{tpu_custom_call.1} parent=1 // pred_check_branch
      %14 = sbr.rel (0) target = $region5
    $region4: #{tpu_custom_call.1} parent=1 // pred_region
      %16 = vsyncadd [#allocation3], 0
      %s17 = sshll.u32 %s0, 4
      %s18 = int_to_ptr.hbm [resolvable:$true] %s17
      %s19 = sshll.u32 [#allocation2], 4
      %s20 = int_to_ptr.vmem [resolvable:$true] %s19
      %25 = dma.hbm_to_vmem [thread:$0]  %s18, 256, %s20, [#allocation3], 128, 128, 8
    $region5: #{tpu_custom_call.1} parent=1 // pred_fallthru
      _
    // Predicated region
    $region6: #{tpu_custom_call.1} parent=1 // pred_check
      _
    $region7: #{tpu_custom_call.1} parent=1 // pred_check_branch
      %27 = sbr.rel (0) target = $region9
    $region8: #{tpu_custom_call.1} parent=1 // pred_region
      %29 = vsyncadd [#allocation6], 0
      %s30 = sshll.u32 %s1, 4
      %s31 = int_to_ptr.hbm [resolvable:$true] %s30
      %s32 = sshll.u32 [#allocation5], 4
      %s33 = int_to_ptr.vmem [resolvable:$true] %s32
      %38 = dma.hbm_to_vmem [thread:$0]  %s31, 4096, %s33, [#allocation6], 128, 128, 8
    $region9: #{tpu_custom_call.1} parent=1 // pred_fallthru
      _
    // Predicated region
    $region10: #{tpu_custom_call.1} parent=1 // pred_check
      _
    $region11: #{tpu_custom_call.1} parent=1 // pred_check_branch
      %40 = sbr.rel (0) target = $region13
    $region12: #{tpu_custom_call.1} parent=1 // pred_region
      %42 = vsyncadd [#allocation6], 0
      %s43 = sshll.u32 %s2, 4
      %s44 = int_to_ptr.hbm [resolvable:$true] %s43
      %s45 = sshll.u32 [#allocation7], 4
      %s46 = int_to_ptr.vmem [resolvable:$true] %s45
      %51 = dma.hbm_to_vmem [thread:$0]  %s44, 128, %s46, [#allocation6], 64, 64, 4
    $region13: #{tpu_custom_call.1} parent=1 // pred_fallthru
      _
    // Predicated region
    $region14: #{tpu_custom_call.1} parent=1 // pred_check
      _
    $region15: #{tpu_custom_call.1} parent=1 // pred_check_branch
      %53 = sbr.rel (0) target = $region17
    $region16: #{tpu_custom_call.1} parent=1 // pred_region
      %55 = vsyncadd [#allocation9], 0
      %s56 = sshll.u32 %s3, 4
      %s57 = int_to_ptr.hbm [resolvable:$true] %s56
      %s58 = sshll.u32 [#allocation8], 4
      %s59 = int_to_ptr.vmem [resolvable:$true] %s58
      %64 = dma.hbm_to_vmem [thread:$0]  %s57, 2048, %s59, [#allocation9], 128, 128, 8
    $region17: #{tpu_custom_call.1} parent=1 // pred_fallthru
      _
    // Predicated region
    $region18: #{tpu_custom_call.1} parent=1 // pred_check
      _
    $region19: #{tpu_custom_call.1} parent=1 // pred_check_branch
      %66 = sbr.rel (0) target = $region21
    $region20: #{tpu_custom_call.1} parent=1 // pred_region
      %68 = dma.done [#allocation3], 256
    $region21: #{tpu_custom_call.1} parent=1 // pred_fallthru
      _
    // Predicated region
    $region22: #{tpu_custom_call.1} parent=1 // pred_check
      _
    $region23: #{tpu_custom_call.1} parent=1 // pred_check_branch
      %70 = sbr.rel (0) target = $region25
    $region24: #{tpu_custom_call.1} parent=1 // pred_region
      %72 = dma.done [#allocation6], 4096
    $region25: #{tpu_custom_call.1} parent=1 // pred_fallthru
      _
    // Predicated region
    $region26: #{tpu_custom_call.1} parent=1 // pred_check
      _
    $region27: #{tpu_custom_call.1} parent=1 // pred_check_branch
      %74 = sbr.rel (0) target = $region29
    $region28: #{tpu_custom_call.1} parent=1 // pred_region
      %76 = dma.done [#allocation6], 128
    $region29: #{tpu_custom_call.1} parent=1 // pred_fallthru
      _
    // Predicated region
    $region30: #{tpu_custom_call.1} parent=1 // pred_check
      _
    $region31: #{tpu_custom_call.1} parent=1 // pred_check_branch
      %78 = sbr.rel (0) target = $region33
    $region32: #{tpu_custom_call.1} parent=1 // pred_region
      %80 = dma.done [#allocation9], 2048
    $region33: #{tpu_custom_call.1} parent=1 // pred_fallthru
      _
    %p81 = scmp.eq.s32.totalorder 0, 0
    // Predicated region
    $region34: #{tpu_custom_call.1} parent=1 // pred_check
      %p82 = pneg %p81
    $region35: #{tpu_custom_call.1} parent=1 // pred_check_branch
      %84 = sbr.rel (%p82) target = $region37
    $region36: #{tpu_custom_call.1} parent=1 // pred_region
      %v85 = vld [vmem:[#allocation7] sm:$0xf]
      %v86 = vld [vmem:[#allocation7 + $0x4] sm:$0xf]
      %v87 = vld [vmem:[#allocation8] sm:$0xff]
      %v88 = vld [vmem:[#allocation8 + $0x8] sm:$0xff]
      %v89 = vld [vmem:[#allocation8 + $0x10] sm:$0xff]
      %v90 = vld [vmem:[#allocation8 + $0x18] sm:$0xff]
      %v91 = vld [vmem:[#allocation8 + $0x20] sm:$0xff]
      %v92 = vld [vmem:[#allocation8 + $0x28] sm:$0xff]
      %v93 = vld [vmem:[#allocation8 + $0x30] sm:$0xff]
      %v94 = vld [vmem:[#allocation8 + $0x38] sm:$0xff]
      %v95 = vld [vmem:[#allocation8 + $0x40] sm:$0xff]
      %v96 = vld [vmem:[#allocation8 + $0x48] sm:$0xff]
      %v97 = vld [vmem:[#allocation8 + $0x50] sm:$0xff]
      %v98 = vld [vmem:[#allocation8 + $0x58] sm:$0xff]
      %v99 = vld [vmem:[#allocation8 + $0x60] sm:$0xff]
      %v100 = vld [vmem:[#allocation8 + $0x68] sm:$0xff]
      %v101 = vld [vmem:[#allocation8 + $0x70] sm:$0xff]
      %v102 = vld [vmem:[#allocation8 + $0x78] sm:$0xff]
      %v105 = vunpack.c.l.b16 %v85
      %v106 = vunpack.c.l.b16 %v86
      %v107 = vpack.c.b16 %v106, %v105
      %v125 = vunpack.c.l.b16 %v87
      %v126 = vunpack.c.h.b16 %v87
      %v127 = vunpack.c.l.b16 %v88
      %v128 = vunpack.c.h.b16 %v88
      %v129 = vunpack.c.l.b16 %v89
      %v130 = vunpack.c.h.b16 %v89
      %v131 = vunpack.c.l.b16 %v90
      %v132 = vunpack.c.h.b16 %v90
      %v133 = vunpack.c.l.b16 %v91
      %v134 = vunpack.c.h.b16 %v91
      %v135 = vunpack.c.l.b16 %v92
      %v136 = vunpack.c.h.b16 %v92
      %v137 = vunpack.c.l.b16 %v93
      %v138 = vunpack.c.h.b16 %v93
      %v139 = vunpack.c.l.b16 %v94
      %v140 = vunpack.c.h.b16 %v94
      %v141 = vunpack.c.l.b16 %v95
      %v142 = vunpack.c.h.b16 %v95
      %v143 = vunpack.c.l.b16 %v96
      %v144 = vunpack.c.h.b16 %v96
      %v145 = vunpack.c.l.b16 %v97
      %v146 = vunpack.c.h.b16 %v97
      %v147 = vunpack.c.l.b16 %v98
      %v148 = vunpack.c.h.b16 %v98
      %v149 = vunpack.c.l.b16 %v99
      %v150 = vunpack.c.h.b16 %v99
      %v151 = vunpack.c.l.b16 %v100
      %v152 = vunpack.c.h.b16 %v100
      %v153 = vunpack.c.l.b16 %v101
      %v154 = vunpack.c.h.b16 %v101
      %v155 = vunpack.c.l.b16 %v102
      %v156 = vunpack.c.h.b16 %v102
      %v157 = vpack.c.b16 %v127, %v125
      %v158 = vpack.c.b16 %v128, %v126
      %v159 = vpack.c.b16 %v131, %v129
      %v160 = vpack.c.b16 %v132, %v130
      %v161 = vpack.c.b16 %v135, %v133
      %v162 = vpack.c.b16 %v136, %v134
      %v163 = vpack.c.b16 %v139, %v137
      %v164 = vpack.c.b16 %v140, %v138
      %v165 = vpack.c.b16 %v143, %v141
      %v166 = vpack.c.b16 %v144, %v142
      %v167 = vpack.c.b16 %v147, %v145
      %v168 = vpack.c.b16 %v148, %v146
      %v169 = vpack.c.b16 %v151, %v149
      %v170 = vpack.c.b16 %v152, %v150
      %v171 = vpack.c.b16 %v155, %v153
      %v172 = vpack.c.b16 %v156, %v154
      %189 = vmatpush.bf16.msra.mxu0 %v171
      %190 = vmatpush.bf16.msra.mxu0 %v169
      %191 = vmatpush.bf16.msra.mxu0 %v167
      %192 = vmatpush.bf16.msra.mxu0 %v165
      %193 = vmatpush.bf16.msra.mxu0 %v163
      %194 = vmatpush.bf16.msra.mxu0 %v161
      %195 = vmatpush.bf16.msra.mxu0 %v159
      %196 = vmatpush.bf16.msra.mxu0 %v157
      %197 = vmatmul.bf16.gmra.mxu0 %v107
      %v198 = vpop.f32.mrf.mxu0
      %v199 = vadd.f32 0.0, %v198
      %v200 = vpop.f32.mrf.mxu0
      %v201 = vadd.f32 0.0, %v200
      %202 = vdwg.mxu0
      %203 = vmatpush.bf16.msra.mxu0 %v172
      %204 = vmatpush.bf16.msra.mxu0 %v170
      %205 = vmatpush.bf16.msra.mxu0 %v168
      %206 = vmatpush.bf16.msra.mxu0 %v166
      %207 = vmatpush.bf16.msra.mxu0 %v164
      %208 = vmatpush.bf16.msra.mxu0 %v162
      %209 = vmatpush.bf16.msra.mxu0 %v160
      %210 = vmatpush.bf16.msra.mxu0 %v158
      %211 = vmatmul.bf16.gmra.mxu0 %v107
      %v212 = vpop.f32.mrf.mxu0
      %v213 = vadd.f32 0.0, %v212
      %v214 = vpop.f32.mrf.mxu0
      %v215 = vadd.f32 0.0, %v214
      %216 = vdwg.mxu0
      %217 = vst [vmem:[#allocation10] sm:$0xff] %v199
      %218 = vst [vmem:[#allocation10 + $0x8] sm:$0xff] %v213
      %219 = vst [vmem:[#allocation10 + $0x10] sm:$0xff] %v201
      %220 = vst [vmem:[#allocation10 + $0x18] sm:$0xff] %v215
    $region37: #{tpu_custom_call.1} parent=1 // pred_fallthru
      _
    %v221 = vld [vmem:[#allocation10] sm:$0xff]
    %v222 = vld [vmem:[#allocation10 + $0x8] sm:$0xff]
    %v223 = vld [vmem:[#allocation10 + $0x10] sm:$0xff]
    %v224 = vld [vmem:[#allocation10 + $0x18] sm:$0xff]
    %v225 = vld [vmem:[#allocation2] sm:$0xff]
    %v226 = vld [vmem:[#allocation2 + $0x8] sm:$0xff]
    %v227 = vld [vmem:[#allocation5] sm:$0xff]
    %v228 = vld [vmem:[#allocation5 + $0x8] sm:$0xff]
    %v229 = vld [vmem:[#allocation5 + $0x10] sm:$0xff]
    %v230 = vld [vmem:[#allocation5 + $0x18] sm:$0xff]
    %v231 = vld [vmem:[#allocation5 + $0x20] sm:$0xff]
    %v232 = vld [vmem:[#allocation5 + $0x28] sm:$0xff]
    %v233 = vld [vmem:[#allocation5 + $0x30] sm:$0xff]
    %v234 = vld [vmem:[#allocation5 + $0x38] sm:$0xff]
    %v235 = vld [vmem:[#allocation5 + $0x40] sm:$0xff]
    %v236 = vld [vmem:[#allocation5 + $0x48] sm:$0xff]
    %v237 = vld [vmem:[#allocation5 + $0x50] sm:$0xff]
    %v238 = vld [vmem:[#allocation5 + $0x58] sm:$0xff]
    %v239 = vld [vmem:[#allocation5 + $0x60] sm:$0xff]
    %v240 = vld [vmem:[#allocation5 + $0x68] sm:$0xff]
    %v241 = vld [vmem:[#allocation5 + $0x70] sm:$0xff]
    %v242 = vld [vmem:[#allocation5 + $0x78] sm:$0xff]
    %v243 = vld [vmem:[#allocation5 + $0x80] sm:$0xff]
    %v244 = vld [vmem:[#allocation5 + $0x88] sm:$0xff]
    %v245 = vld [vmem:[#allocation5 + $0x90] sm:$0xff]
    %v246 = vld [vmem:[#allocation5 + $0x98] sm:$0xff]
    %v247 = vld [vmem:[#allocation5 + $0xa0] sm:$0xff]
    %v248 = vld [vmem:[#allocation5 + $0xa8] sm:$0xff]
    %v249 = vld [vmem:[#allocation5 + $0xb0] sm:$0xff]
    %v250 = vld [vmem:[#allocation5 + $0xb8] sm:$0xff]
    %v251 = vld [vmem:[#allocation5 + $0xc0] sm:$0xff]
    %v252 = vld [vmem:[#allocation5 + $0xc8] sm:$0xff]
    %v253 = vld [vmem:[#allocation5 + $0xd0] sm:$0xff]
    %v254 = vld [vmem:[#allocation5 + $0xd8] sm:$0xff]
    %v255 = vld [vmem:[#allocation5 + $0xe0] sm:$0xff]
    %v256 = vld [vmem:[#allocation5 + $0xe8] sm:$0xff]
    %v257 = vld [vmem:[#allocation5 + $0xf0] sm:$0xff]
    %v258 = vld [vmem:[#allocation5 + $0xf8] sm:$0xff]
    %v261 = vunpack.c.l.b16 %v225
    %v262 = vunpack.c.h.b16 %v225
    %v263 = vunpack.c.l.b16 %v226
    %v264 = vunpack.c.h.b16 %v226
    %v265 = vpack.c.b16 %v263, %v261
    %v266 = vpack.c.b16 %v264, %v262
    %v301 = vunpack.c.l.b16 %v227
    %v302 = vunpack.c.h.b16 %v227
    %v303 = vunpack.c.l.b16 %v228
    %v304 = vunpack.c.h.b16 %v228
    %v305 = vunpack.c.l.b16 %v229
    %v306 = vunpack.c.h.b16 %v229
    %v307 = vunpack.c.l.b16 %v230
    %v308 = vunpack.c.h.b16 %v230
    %v309 = vunpack.c.l.b16 %v231
    %v310 = vunpack.c.h.b16 %v231
    %v311 = vunpack.c.l.b16 %v232
    %v312 = vunpack.c.h.b16 %v232
    %v313 = vunpack.c.l.b16 %v233
    %v314 = vunpack.c.h.b16 %v233
    %v315 = vunpack.c.l.b16 %v234
    %v316 = vunpack.c.h.b16 %v234
    %v317 = vunpack.c.l.b16 %v235
    %v318 = vunpack.c.h.b16 %v235
    %v319 = vunpack.c.l.b16 %v236
    %v320 = vunpack.c.h.b16 %v236
    %v321 = vunpack.c.l.b16 %v237
    %v322 = vunpack.c.h.b16 %v237
    %v323 = vunpack.c.l.b16 %v238
    %v324 = vunpack.c.h.b16 %v238
    %v325 = vunpack.c.l.b16 %v239
    %v326 = vunpack.c.h.b16 %v239
    %v327 = vunpack.c.l.b16 %v240
    %v328 = vunpack.c.h.b16 %v240
    %v329 = vunpack.c.l.b16 %v241
    %v330 = vunpack.c.h.b16 %v241
    %v331 = vunpack.c.l.b16 %v242
    %v332 = vunpack.c.h.b16 %v242
    %v333 = vunpack.c.l.b16 %v243
    %v334 = vunpack.c.h.b16 %v243
    %v335 = vunpack.c.l.b16 %v244
    %v336 = vunpack.c.h.b16 %v244
    %v337 = vunpack.c.l.b16 %v245
    %v338 = vunpack.c.h.b16 %v245
    %v339 = vunpack.c.l.b16 %v246
    %v340 = vunpack.c.h.b16 %v246
    %v341 = vunpack.c.l.b16 %v247
    %v342 = vunpack.c.h.b16 %v247
    %v343 = vunpack.c.l.b16 %v248
    %v344 = vunpack.c.h.b16 %v248
    %v345 = vunpack.c.l.b16 %v249
    %v346 = vunpack.c.h.b16 %v249
    %v347 = vunpack.c.l.b16 %v250
    %v348 = vunpack.c.h.b16 %v250
    %v349 = vunpack.c.l.b16 %v251
    %v350 = vunpack.c.h.b16 %v251
    %v351 = vunpack.c.l.b16 %v252
    %v352 = vunpack.c.h.b16 %v252
    %v353 = vunpack.c.l.b16 %v253
    %v354 = vunpack.c.h.b16 %v253
    %v355 = vunpack.c.l.b16 %v254
    %v356 = vunpack.c.h.b16 %v254
    %v357 = vunpack.c.l.b16 %v255
    %v358 = vunpack.c.h.b16 %v255
    %v359 = vunpack.c.l.b16 %v256
    %v360 = vunpack.c.h.b16 %v256
    %v361 = vunpack.c.l.b16 %v257
    %v362 = vunpack.c.h.b16 %v257
    %v363 = vunpack.c.l.b16 %v258
    %v364 = vunpack.c.h.b16 %v258
    %v365 = vpack.c.b16 %v303, %v301
    %v366 = vpack.c.b16 %v304, %v302
    %v367 = vpack.c.b16 %v307, %v305
    %v368 = vpack.c.b16 %v308, %v306
    %v369 = vpack.c.b16 %v311, %v309
    %v370 = vpack.c.b16 %v312, %v310
    %v371 = vpack.c.b16 %v315, %v313
    %v372 = vpack.c.b16 %v316, %v314
    %v373 = vpack.c.b16 %v319, %v317
    %v374 = vpack.c.b16 %v320, %v318
    %v375 = vpack.c.b16 %v323, %v321
    %v376 = vpack.c.b16 %v324, %v322
    %v377 = vpack.c.b16 %v327, %v325
    %v378 = vpack.c.b16 %v328, %v326
    %v379 = vpack.c.b16 %v331, %v329
    %v380 = vpack.c.b16 %v332, %v330
    %v381 = vpack.c.b16 %v335, %v333
    %v382 = vpack.c.b16 %v336, %v334
    %v383 = vpack.c.b16 %v339, %v337
    %v384 = vpack.c.b16 %v340, %v338
    %v385 = vpack.c.b16 %v343, %v341
    %v386 = vpack.c.b16 %v344, %v342
    %v387 = vpack.c.b16 %v347, %v345
    %v388 = vpack.c.b16 %v348, %v346
    %v389 = vpack.c.b16 %v351, %v349
    %v390 = vpack.c.b16 %v352, %v350
    %v391 = vpack.c.b16 %v355, %v353
    %v392 = vpack.c.b16 %v356, %v354
    %v393 = vpack.c.b16 %v359, %v357
    %v394 = vpack.c.b16 %v360, %v358
    %v395 = vpack.c.b16 %v363, %v361
    %v396 = vpack.c.b16 %v364, %v362
    %429 = vmatpush.bf16.msra.mxu0 %v379
    %430 = vmatpush.bf16.msra.mxu0 %v377
    %431 = vmatpush.bf16.msra.mxu0 %v375
    %432 = vmatpush.bf16.msra.mxu0 %v373
    %433 = vmatpush.bf16.msra.mxu0 %v371
    %434 = vmatpush.bf16.msra.mxu0 %v369
    %435 = vmatpush.bf16.msra.mxu0 %v367
    %436 = vmatpush.bf16.msra.mxu0 %v365
    %437 = vmatmul.bf16.gmra.mxu0 %v265
    %v438 = vpop.f32.mrf.mxu0
    %v439 = vadd.f32 0.0, %v438
    %v440 = vpop.f32.mrf.mxu0
    %v441 = vadd.f32 0.0, %v440
    %442 = vdwg.mxu0
    %443 = vmatpush.bf16.msra.mxu0 %v395
    %444 = vmatpush.bf16.msra.mxu0 %v393
    %445 = vmatpush.bf16.msra.mxu0 %v391
    %446 = vmatpush.bf16.msra.mxu0 %v389
    %447 = vmatpush.bf16.msra.mxu0 %v387
    %448 = vmatpush.bf16.msra.mxu0 %v385
    %449 = vmatpush.bf16.msra.mxu0 %v383
    %450 = vmatpush.bf16.msra.mxu0 %v381
    %451 = vmatmul.bf16.gmra.mxu0 %v266
    %v452 = vpop.f32.mrf.mxu0
    %v453 = vadd.f32 %v439, %v452
    %v454 = vpop.f32.mrf.mxu0
    %v455 = vadd.f32 %v441, %v454
    %456 = vdwg.mxu0
    %457 = vmatpush.bf16.msra.mxu0 %v380
    %458 = vmatpush.bf16.msra.mxu0 %v378
    %459 = vmatpush.bf16.msra.mxu0 %v376
    %460 = vmatpush.bf16.msra.mxu0 %v374
    %461 = vmatpush.bf16.msra.mxu0 %v372
    %462 = vmatpush.bf16.msra.mxu0 %v370
    %463 = vmatpush.bf16.msra.mxu0 %v368
    %464 = vmatpush.bf16.msra.mxu0 %v366
    %465 = vmatmul.bf16.gmra.mxu0 %v265
    %v466 = vpop.f32.mrf.mxu0
    %v467 = vadd.f32 0.0, %v466
    %v468 = vpop.f32.mrf.mxu0
    %v469 = vadd.f32 0.0, %v468
    %470 = vdwg.mxu0
    %471 = vmatpush.bf16.msra.mxu0 %v396
    %472 = vmatpush.bf16.msra.mxu0 %v394
    %473 = vmatpush.bf16.msra.mxu0 %v392
    %474 = vmatpush.bf16.msra.mxu0 %v390
    %475 = vmatpush.bf16.msra.mxu0 %v388
    %476 = vmatpush.bf16.msra.mxu0 %v386
    %477 = vmatpush.bf16.msra.mxu0 %v384
    %478 = vmatpush.bf16.msra.mxu0 %v382
    %479 = vmatmul.bf16.gmra.mxu0 %v266
    %v480 = vpop.f32.mrf.mxu0
    %v481 = vadd.f32 %v467, %v480
    %v482 = vpop.f32.mrf.mxu0
    %v483 = vadd.f32 %v469, %v482
    %484 = vdwg.mxu0
    %v485 = vadd.f32 %v221, %v453
    %v486 = vadd.f32 %v222, %v481
    %v487 = vadd.f32 %v223, %v455
    %v488 = vadd.f32 %v224, %v483
    %489 = vst [vmem:[#allocation10] sm:$0xff] %v485
    %490 = vst [vmem:[#allocation10 + $0x8] sm:$0xff] %v486
    %491 = vst [vmem:[#allocation10 + $0x10] sm:$0xff] %v487
    %492 = vst [vmem:[#allocation10 + $0x18] sm:$0xff] %v488
    // Predicated region
    $region38: #{tpu_custom_call.1} parent=1 // pred_check
      _
    $region39: #{tpu_custom_call.1} parent=1 // pred_check_branch
      %494 = sbr.rel (0) target = $region41
    $region40: #{tpu_custom_call.1} parent=1 // pred_region
      %496 = vsyncadd [#allocation4], 0
      %s497 = sshll.u32 [#allocation10], 4
      %s498 = int_to_ptr.vmem [resolvable:$true] %s497
      %s499 = sshll.u32 %s4, 4
      %s500 = int_to_ptr.hbm [resolvable:$true] %s499
      %505 = dma.vmem_to_hbm [thread:$0]  %s498, 512, %s500, [#allocation4], 256, 256, 16
    $region41: #{tpu_custom_call.1} parent=1 // pred_fallthru
      _
    // Predicated region
    $region42: #{tpu_custom_call.1} parent=1 // pred_check
      _
    $region43: #{tpu_custom_call.1} parent=1 // pred_check_branch
      %507 = sbr.rel (0) target = $region45
    $region44: #{tpu_custom_call.1} parent=1 // pred_region
      %509 = dma.done [#allocation4], 512
    $region45: #{tpu_custom_call.1} parent=1 // pred_fallthru
      _
    %510 = vsyncpa [#allocation3], 1
    %511 = vsyncpa [#allocation6], 1
    %512 = vsyncpa [#allocation9], 1
    %513 = vsyncpa [#allocation4], 1

</llo_original>
